<compile_context>
chip_gen: v5e
topology: v5e:2x2
jax: 0.10.0
libtpu: 0.0.40
codegen_flags: <defaults>
</compile_context>

<pallas_src>
import jax
import jax.numpy as jnp
from jax.experimental import pallas as pl
from jax.experimental.pallas import tpu as pltpu

# Small shapes consistent with the module's forward (original hidden_d=512).
HIDDEN_D = 32      # per-timestep feature size (hidden_d)
HIDDEN_D2 = 100    # hidden_d2
N_CLASSES = 3
N_HOPS = 10        # W_s2_last output size (number of attention hops)
SEQ = 8
BATCH = 2

# Lane-dense padded sizes used inside the kernel.
D2P = 128          # hidden_d2 padded to a full lane tile
KP = 16            # attention hops padded to a sublane multiple
CP = 128           # n_classes padded so the output store is a full lane tile


def classifier_kernel(x_ref, ws1_ref, bs1_ref, ws2_ref, bs2_ref,
                      wprev_ref, bprev_ref, wout_ref, bout_ref, o_ref):
    S, B, H = x_ref.shape           # seq-major input, exactly as the module receives it
    KPk = ws2_ref.shape[1]

    # fc_input.permute(1, 0, 2): gather each batch's (S, H) slab and stack them
    # batch-major.  Static slices + a sublane concat (no 3-D minor transpose).
    xf = jnp.concatenate([x_ref[:, b, :] for b in range(B)], axis=0)     # (B*S, H)
    xb = xf.reshape(B, S, H)                                             # (B, S, H)

    # attention_net_last: W_s2(tanh(W_s1(x))) as two lane-dense 2-D matmuls.
    s1 = jnp.tanh(jnp.dot(xf, ws1_ref[...], preferred_element_type=jnp.float32)
                  + bs1_ref[...])                                        # (B*S, D2P)
    s2 = (jnp.dot(s1, ws2_ref[...], preferred_element_type=jnp.float32)
          + bs2_ref[...]).reshape(B, S, KPk)                             # (B, S, KP)

    # permute(0,2,1) + softmax(dim=2)  ==  softmax over the sequence axis.
    m = jnp.max(s2, axis=1, keepdims=True)
    e = jnp.exp(s2 - m)
    attn = e / jnp.sum(e, axis=1, keepdims=True)                         # (B, S, KP)

    # hidden_matrix = bmm(attn^T, x) for all batch rows in one batched matmul.
    attn_t = jnp.swapaxes(attn, 1, 2)                                    # (B, KP, S)
    hidden = jnp.einsum('bks,bsh->bkh', attn_t, xb,
                        preferred_element_type=jnp.float32)              # (B, KP, H)

    # prev_out on the row-major (hop, feature) flatten of hidden, expressed as
    # one hop-batched matmul against the (KP, H, D2P) weight followed by a
    # reduction over hops.  Padded hops (k >= 10) contract with zero weight
    # rows, so they cannot affect acc.
    hidden_k = jnp.swapaxes(hidden, 0, 1)                                # (KP, B, H)
    per_hop = jnp.einsum('kbh,khd->kbd', hidden_k, wprev_ref[...],
                         preferred_element_type=jnp.float32)             # (KP, B, D2P)
    acc = jnp.sum(per_hop, axis=0) + bprev_ref[...]                      # (B, D2P)

    # nn.Dropout(p=0.2) is identity at inference.  Final classifier head,
    # written as a lane-dense (B, 128) slab.
    logits = jnp.dot(acc, wout_ref[...],
                     preferred_element_type=jnp.float32) + bout_ref[...]  # (B, CP)
    o_ref[...] = logits


@jax.jit
def classifier_lstm_forward(fc_input, params):
    # fc_input stays in its native (SEQ, BATCH, HIDDEN_D) layout — no wrapper
    # transpose; the permute(1,0,2) happens inside the kernel.
    S, B, H = fc_input.shape
    ws1, bs1, ws2, bs2, wprev, bprev, wout, bout = params
    f32 = jnp.float32

    # Wrapper-only weight prep (one-time): zero-pad to lane-dense sizes and
    # pre-reshape prev_out's weight to (hop, feature, out).
    ws1p = jnp.pad(ws1.astype(f32), ((0, 0), (0, D2P - HIDDEN_D2)))          # (H, 128)
    bs1p = jnp.pad(bs1.astype(f32), (0, D2P - HIDDEN_D2)).reshape(1, D2P)
    ws2p = jnp.pad(ws2.astype(f32), ((0, D2P - HIDDEN_D2), (0, KP - N_HOPS)))  # (128, 16)
    bs2p = jnp.pad(bs2.astype(f32), (0, KP - N_HOPS)).reshape(1, KP)
    wprev3 = jnp.pad(wprev.astype(f32).reshape(N_HOPS, H, HIDDEN_D2),
                     ((0, KP - N_HOPS), (0, 0), (0, D2P - HIDDEN_D2)))       # (16, H, 128)
    bprevp = jnp.pad(bprev.astype(f32), (0, D2P - HIDDEN_D2)).reshape(1, D2P)
    woutp = jnp.pad(wout.astype(f32), ((0, D2P - HIDDEN_D2), (0, CP - N_CLASSES)))  # (128, 128)
    boutp = jnp.pad(bout.astype(f32), (0, CP - N_CLASSES)).reshape(1, CP)

    vmem = pl.BlockSpec(memory_space=pltpu.MemorySpace.VMEM)
    logits_padded = pl.pallas_call(
        classifier_kernel,
        out_shape=jax.ShapeDtypeStruct((B, CP), jnp.float32),
        in_specs=[vmem] * 9,
        out_specs=vmem,
    )(fc_input.astype(f32), ws1p, bs1p, ws2p, bs2p, wprev3, bprevp, woutp, boutp)

    return logits_padded[:, :N_CLASSES]


def init_params(key, hidden_d):
    # Deterministic PyTorch-style uniform(-1/sqrt(fan_in), 1/sqrt(fan_in)) init.
    ks = jax.random.split(key, 4)

    def lin(k, fan_in, fan_out):
        bound = 1.0 / float(fan_in) ** 0.5
        kw, kb = jax.random.split(k)
        w = jax.random.uniform(kw, (fan_in, fan_out), jnp.float32, -bound, bound)
        b = jax.random.uniform(kb, (fan_out,), jnp.float32, -bound, bound)
        return w, b

    ws1, bs1 = lin(ks[0], hidden_d, 100)                     # W_s1_last
    ws2, bs2 = lin(ks[1], 100, N_HOPS)                       # W_s2_last
    wprev, bprev = lin(ks[2], N_HOPS * hidden_d, HIDDEN_D2)  # prev_out
    wout, bout = lin(ks[3], HIDDEN_D2, N_CLASSES)            # out
    return (ws1, bs1, ws2, bs2, wprev, bprev, wout, bout)


def reference_forward(fc_input, params):
    # Pure-JAX reference mirroring the PyTorch forward (dropout = identity).
    ws1, bs1, ws2, bs2, wprev, bprev, wout, bout = params
    x = jnp.transpose(fc_input, (1, 0, 2))                       # (B, S, H)
    s2 = jnp.tanh(x @ ws1 + bs1) @ ws2 + bs2                     # (B, S, 10)
    attn = jax.nn.softmax(jnp.transpose(s2, (0, 2, 1)), axis=2)  # (B, 10, S)
    hidden = jnp.einsum('bks,bsh->bkh', attn, x)                 # (B, 10, H)
    mixed = hidden.reshape(x.shape[0], -1)                       # (B, 10*H)
    return (mixed @ wprev + bprev) @ wout + bout


if __name__ == "__main__":
    key = jax.random.PRNGKey(0)
    kx, kp = jax.random.split(key)
    fc_input = jax.random.normal(kx, (SEQ, BATCH, HIDDEN_D), jnp.float32)
    params = init_params(kp, HIDDEN_D)

    out = classifier_lstm_forward(fc_input, params)
    jax.block_until_ready(out)

    ref = reference_forward(fc_input, params)
    assert out.shape == (BATCH, N_CLASSES), out.shape
    assert jnp.allclose(out, ref, atol=1e-4, rtol=1e-4), (out, ref)
    print("KERNEL_OK")
</pallas_src>

<mosaic_0001>
module attributes {stable_mosaic.version = 11 : i64} {
  func.func @classifier_kernel(%arg0: memref<8x2x32xf32, #tpu.memory_space<vmem>>, %arg1: memref<32x128xf32, #tpu.memory_space<vmem>>, %arg2: memref<1x128xf32, #tpu.memory_space<vmem>>, %arg3: memref<128x16xf32, #tpu.memory_space<vmem>>, %arg4: memref<1x16xf32, #tpu.memory_space<vmem>>, %arg5: memref<16x32x128xf32, #tpu.memory_space<vmem>>, %arg6: memref<1x128xf32, #tpu.memory_space<vmem>>, %arg7: memref<128x128xf32, #tpu.memory_space<vmem>>, %arg8: memref<1x128xf32, #tpu.memory_space<vmem>>, %arg9: memref<2x128xf32, #tpu.memory_space<vmem>>) attributes {dimension_semantics = [], scalar_prefetch = 0 : i64, scratch_operands = 0 : i64, tpu.core_type = #tpu.core_type<tc>} {
    %c0 = arith.constant 0 : index
    %c0_0 = arith.constant 0 : index
    %c0_1 = arith.constant 0 : index
    %0 = vector.load %arg0[%c0, %c0_0, %c0_1] : memref<8x2x32xf32, #tpu.memory_space<vmem>>, vector<8x1x32xf32>
    %1 = vector.shape_cast %0 : vector<8x1x32xf32> to vector<8x32xf32>
    %c0_2 = arith.constant 0 : index
    %c1 = arith.constant 1 : index
    %c0_3 = arith.constant 0 : index
    %2 = vector.load %arg0[%c0_2, %c1, %c0_3] : memref<8x2x32xf32, #tpu.memory_space<vmem>>, vector<8x1x32xf32>
    %3 = vector.shape_cast %2 : vector<8x1x32xf32> to vector<8x32xf32>
    %4 = tpu.concatenate %1, %3 in 0 : vector<8x32xf32>, vector<8x32xf32> -> vector<16x32xf32>
    %5 = vector.shape_cast %4 : vector<16x32xf32> to vector<2x8x32xf32>
    %c0_4 = arith.constant 0 : index
    %c0_5 = arith.constant 0 : index
    %6 = vector.load %arg1[%c0_4, %c0_5] : memref<32x128xf32, #tpu.memory_space<vmem>>, vector<32x128xf32>
    %cst = arith.constant dense<0.000000e+00> : vector<16x128xf32>
    %7 = tpu.matmul %4, %6, %cst {dimension_numbers = #tpu.dot_dimension_numbers<[1], [0], [0], [1], [0, 0, 1, 1], [], []>} : vector<16x32xf32>, vector<32x128xf32>, vector<16x128xf32> -> vector<16x128xf32>
    %c0_6 = arith.constant 0 : index
    %c0_7 = arith.constant 0 : index
    %8 = vector.load %arg2[%c0_6, %c0_7] : memref<1x128xf32, #tpu.memory_space<vmem>>, vector<1x128xf32>
    %9 = vector.broadcast %8 : vector<1x128xf32> to vector<16x128xf32>
    %10 = arith.addf %7, %9 : vector<16x128xf32>
    %11 = math.tanh %10 : vector<16x128xf32>
    %c0_8 = arith.constant 0 : index
    %c0_9 = arith.constant 0 : index
    %12 = vector.load %arg3[%c0_8, %c0_9] : memref<128x16xf32, #tpu.memory_space<vmem>>, vector<128x16xf32>
    %cst_10 = arith.constant dense<0.000000e+00> : vector<16x16xf32>
    %13 = tpu.matmul %11, %12, %cst_10 {dimension_numbers = #tpu.dot_dimension_numbers<[1], [0], [0], [1], [0, 0, 1, 1], [], []>} : vector<16x128xf32>, vector<128x16xf32>, vector<16x16xf32> -> vector<16x16xf32>
    %c0_11 = arith.constant 0 : index
    %c0_12 = arith.constant 0 : index
    %14 = vector.load %arg4[%c0_11, %c0_12] : memref<1x16xf32, #tpu.memory_space<vmem>>, vector<1x16xf32>
    %15 = vector.broadcast %14 : vector<1x16xf32> to vector<16x16xf32>
    %16 = arith.addf %13, %15 : vector<16x16xf32>
    %17 = vector.shape_cast %16 : vector<16x16xf32> to vector<2x8x16xf32>
    %cst_13 = arith.constant dense<0xFF800000> : vector<2x16xf32>
    %18 = vector.multi_reduction <maximumf>, %17, %cst_13 [1] : vector<2x8x16xf32> to vector<2x16xf32>
    %19 = vector.shape_cast %18 : vector<2x16xf32> to vector<2x1x16xf32>
    %20 = vector.broadcast %19 : vector<2x1x16xf32> to vector<2x8x16xf32>
    %21 = arith.subf %17, %20 : vector<2x8x16xf32>
    %22 = math.exp %21 : vector<2x8x16xf32>
    %cst_14 = arith.constant dense<0.000000e+00> : vector<2x16xf32>
    %23 = vector.multi_reduction <add>, %22, %cst_14 [1] : vector<2x8x16xf32> to vector<2x16xf32>
    %24 = vector.shape_cast %23 : vector<2x16xf32> to vector<2x1x16xf32>
    %25 = vector.broadcast %24 : vector<2x1x16xf32> to vector<2x8x16xf32>
    %26 = arith.divf %22, %25 : vector<2x8x16xf32>
    %27 = tpu.transpose %26, [0, 2, 1] : vector<2x8x16xf32> -> vector<2x16x8xf32>
    "tpu.trace_start"() <{level = 10 : i32, message = "bks,bsh->bkh"}> : () -> ()
    %cst_15 = arith.constant dense<0.000000e+00> : vector<2x16x32xf32>
    %28 = tpu.matmul %27, %5, %cst_15 {dimension_numbers = #tpu.dot_dimension_numbers<[2], [1], [1], [2], [0, 0, 0, 1, 1, 2], [0], [0]>} : vector<2x16x8xf32>, vector<2x8x32xf32>, vector<2x16x32xf32> -> vector<2x16x32xf32>
    "tpu.trace_stop"() : () -> ()
    %29 = tpu.transpose %28, [1, 0, 2] : vector<2x16x32xf32> -> vector<16x2x32xf32>
    %c0_16 = arith.constant 0 : index
    %c0_17 = arith.constant 0 : index
    %c0_18 = arith.constant 0 : index
    %30 = vector.load %arg5[%c0_16, %c0_17, %c0_18] : memref<16x32x128xf32, #tpu.memory_space<vmem>>, vector<16x32x128xf32>
    "tpu.trace_start"() <{level = 10 : i32, message = "kbh,khd->kbd"}> : () -> ()
    %cst_19 = arith.constant dense<0.000000e+00> : vector<16x2x128xf32>
    %31 = tpu.matmul %29, %30, %cst_19 {dimension_numbers = #tpu.dot_dimension_numbers<[2], [1], [1], [2], [0, 0, 0, 1, 1, 2], [0], [0]>} : vector<16x2x32xf32>, vector<16x32x128xf32>, vector<16x2x128xf32> -> vector<16x2x128xf32>
    "tpu.trace_stop"() : () -> ()
    %cst_20 = arith.constant dense<0.000000e+00> : vector<2x128xf32>
    %32 = vector.multi_reduction <add>, %31, %cst_20 [0] : vector<16x2x128xf32> to vector<2x128xf32>
    %c0_21 = arith.constant 0 : index
    %c0_22 = arith.constant 0 : index
    %33 = vector.load %arg6[%c0_21, %c0_22] : memref<1x128xf32, #tpu.memory_space<vmem>>, vector<1x128xf32>
    %34 = vector.broadcast %33 : vector<1x128xf32> to vector<2x128xf32>
    %35 = arith.addf %32, %34 : vector<2x128xf32>
    %c0_23 = arith.constant 0 : index
    %c0_24 = arith.constant 0 : index
    %36 = vector.load %arg7[%c0_23, %c0_24] : memref<128x128xf32, #tpu.memory_space<vmem>>, vector<128x128xf32>
    %cst_25 = arith.constant dense<0.000000e+00> : vector<2x128xf32>
    %37 = tpu.matmul %35, %36, %cst_25 {dimension_numbers = #tpu.dot_dimension_numbers<[1], [0], [0], [1], [0, 0, 1, 1], [], []>} : vector<2x128xf32>, vector<128x128xf32>, vector<2x128xf32> -> vector<2x128xf32>
    %c0_26 = arith.constant 0 : index
    %c0_27 = arith.constant 0 : index
    %38 = vector.load %arg8[%c0_26, %c0_27] : memref<1x128xf32, #tpu.memory_space<vmem>>, vector<1x128xf32>
    %39 = vector.broadcast %38 : vector<1x128xf32> to vector<2x128xf32>
    %40 = arith.addf %37, %39 : vector<2x128xf32>
    %c0_28 = arith.constant 0 : index
    %c0_29 = arith.constant 0 : index
    %41 = vector.load %arg9[%c0_28, %c0_29] : memref<2x128xf32, #tpu.memory_space<vmem>>, vector<2x128xf32>
    tpu.vector_store %arg9[%c0_28, %c0_29], %40 {strides = array<i32>} : memref<2x128xf32, #tpu.memory_space<vmem>>, vector<2x128xf32>,
    return
  }
}

</mosaic_0001>

<llo_original>
// kernel: classifier_lstm_forward.1
$region0: #{classifier_lstm_forward.1}
  #allocation0 [shape = 'u32[]', space=smem, size = 0x4, offset = 0x4, fixed_abs, tag = 'smem constant byte address 0x4 - core index']
  #allocation1 [shape = 'u32[72,128]{1,0:T(1,128)}', space=vmem, size = 0x9000, scoped, tag = 'internal scratch']
  %s0 = inlined_call_operand.vmem [shape: f32[8,2,32], index: 0, kind: input, shape index: {}]
  %s1 = inlined_call_operand.vmem [shape: f32[32,128], index: 1, kind: input, shape index: {}]
  %s2 = inlined_call_operand.vmem [shape: f32[1,128], index: 2, kind: input, shape index: {}]
  %s3 = inlined_call_operand.vmem [shape: f32[128,16], index: 3, kind: input, shape index: {}]
  %s4 = inlined_call_operand.vmem [shape: f32[1,16], index: 4, kind: input, shape index: {}]
  %s5 = inlined_call_operand.vmem [shape: f32[16,32,128], index: 5, kind: input, shape index: {}]
  %s6 = inlined_call_operand.vmem [shape: f32[1,128], index: 6, kind: input, shape index: {}]
  %s7 = inlined_call_operand.vmem [shape: f32[128,128], index: 7, kind: input, shape index: {}]
  %s8 = inlined_call_operand.vmem [shape: f32[1,128], index: 8, kind: input, shape index: {}]
  %s9 = inlined_call_operand.hbm [shape: f32[2,128], index: 9, kind: output, shape index: {}]
  %s10 = sld [smem:[#allocation0]]
  $region46: #{classifier_lstm_forward.1} parent=0
    _
  %s12 = ssub.s32 1, %s10
  %s13 = scalar_select 0, %s12, %s10
  $region1: #{classifier_lstm_forward.1} parent=0
    #allocation2 [shape = 'u8[1024]{0}', space=vmem, size = 0x400, scoped, tag = 'output window, operand 0, single buffered']
    #allocation3 [shape = 's32[1]{0}', space=sflag, size = 0x4, scoped, tag = 'scoped memory for classifier_lstm_forward.1']
    %14 = vsyncpa [#allocation3], 0
    // Predicated region
    $region2: #{classifier_lstm_forward.1} parent=1 // pred_check
      _
    $region3: #{classifier_lstm_forward.1} parent=1 // pred_check_branch
      %16 = sbr.rel (0) target = $region5
    $region4: #{classifier_lstm_forward.1} parent=1 // pred_region
      _
    $region5: #{classifier_lstm_forward.1} parent=1 // pred_fallthru
      _
    // Predicated region
    $region6: #{classifier_lstm_forward.1} parent=1 // pred_check
      _
    $region7: #{classifier_lstm_forward.1} parent=1 // pred_check_branch
      %18 = sbr.rel (0) target = $region9
    $region8: #{classifier_lstm_forward.1} parent=1 // pred_region
      _
    $region9: #{classifier_lstm_forward.1} parent=1 // pred_fallthru
      _
    // Predicated region
    $region10: #{classifier_lstm_forward.1} parent=1 // pred_check
      _
    $region11: #{classifier_lstm_forward.1} parent=1 // pred_check_branch
      %20 = sbr.rel (0) target = $region13
    $region12: #{classifier_lstm_forward.1} parent=1 // pred_region
      _
    $region13: #{classifier_lstm_forward.1} parent=1 // pred_fallthru
      _
    // Predicated region
    $region14: #{classifier_lstm_forward.1} parent=1 // pred_check
      _
    $region15: #{classifier_lstm_forward.1} parent=1 // pred_check_branch
      %22 = sbr.rel (0) target = $region17
    $region16: #{classifier_lstm_forward.1} parent=1 // pred_region
      _
    $region17: #{classifier_lstm_forward.1} parent=1 // pred_fallthru
      _
    // Predicated region
    $region18: #{classifier_lstm_forward.1} parent=1 // pred_check
      _
    $region19: #{classifier_lstm_forward.1} parent=1 // pred_check_branch
      %24 = sbr.rel (0) target = $region21
    $region20: #{classifier_lstm_forward.1} parent=1 // pred_region
      _
    $region21: #{classifier_lstm_forward.1} parent=1 // pred_fallthru
      _
    // Predicated region
    $region22: #{classifier_lstm_forward.1} parent=1 // pred_check
      _
    $region23: #{classifier_lstm_forward.1} parent=1 // pred_check_branch
      %26 = sbr.rel (0) target = $region25
    $region24: #{classifier_lstm_forward.1} parent=1 // pred_region
      _
    $region25: #{classifier_lstm_forward.1} parent=1 // pred_fallthru
      _
    // Predicated region
    $region26: #{classifier_lstm_forward.1} parent=1 // pred_check
      _
    $region27: #{classifier_lstm_forward.1} parent=1 // pred_check_branch
      %28 = sbr.rel (0) target = $region29
    $region28: #{classifier_lstm_forward.1} parent=1 // pred_region
      _
    $region29: #{classifier_lstm_forward.1} parent=1 // pred_fallthru
      _
    // Predicated region
    $region30: #{classifier_lstm_forward.1} parent=1 // pred_check
      _
    $region31: #{classifier_lstm_forward.1} parent=1 // pred_check_branch
      %30 = sbr.rel (0) target = $region33
    $region32: #{classifier_lstm_forward.1} parent=1 // pred_region
      _
    $region33: #{classifier_lstm_forward.1} parent=1 // pred_fallthru
      _
    // Predicated region
    $region34: #{classifier_lstm_forward.1} parent=1 // pred_check
      _
    $region35: #{classifier_lstm_forward.1} parent=1 // pred_check_branch
      %32 = sbr.rel (0) target = $region37
    $region36: #{classifier_lstm_forward.1} parent=1 // pred_region
      _
    $region37: #{classifier_lstm_forward.1} parent=1 // pred_fallthru
      _
    %v33 = vld [vmem:[%s0] sm:$0x1]
    %v34 = vld [vmem:[%s0 + $0x2] sm:$0x1]
    %v35 = vld [vmem:[%s0 + $0x4] sm:$0x1]
    %v36 = vld [vmem:[%s0 + $0x6] sm:$0x1]
    %v37 = vld [vmem:[%s0 + $0x8] sm:$0x1]
    %v38 = vld [vmem:[%s0 + $0xa] sm:$0x1]
    %v39 = vld [vmem:[%s0 + $0xc] sm:$0x1]
    %v40 = vld [vmem:[%s0 + $0xe] sm:$0x1]
    %v41 = vld [vmem:[%s0 + $0x1] sm:$0x1]
    %v42 = vld [vmem:[%s0 + $0x3] sm:$0x1]
    %v43 = vld [vmem:[%s0 + $0x5] sm:$0x1]
    %v44 = vld [vmem:[%s0 + $0x7] sm:$0x1]
    %v45 = vld [vmem:[%s0 + $0x9] sm:$0x1]
    %v46 = vld [vmem:[%s0 + $0xb] sm:$0x1]
    %v47 = vld [vmem:[%s0 + $0xd] sm:$0x1]
    %v48 = vld [vmem:[%s0 + $0xf] sm:$0x1]
    %v57 = vrot.slane %v34, 7
    %vm58 = vcmask 1041409
    %v59 = vsel %vm58, %v57, %v33
    %v60 = vrot.slane %v35, 6
    %vm61 = vcmask 1042434
    %v62 = vsel %vm61, %v60, %v59
    %v63 = vrot.slane %v36, 5
    %vm64 = vcmask 1043459
    %v65 = vsel %vm64, %v63, %v62
    %v66 = vrot.slane %v37, 4
    %vm67 = vcmask 1044484
    %v68 = vsel %vm67, %v66, %v65
    %v69 = vrot.slane %v38, 3
    %vm70 = vcmask 1045509
    %v71 = vsel %vm70, %v69, %v68
    %v72 = vrot.slane %v39, 2
    %vm73 = vcmask 1046534
    %v74 = vsel %vm73, %v72, %v71
    %v75 = vrot.slane %v40, 1
    %vm76 = vcmask 1047559
    %v77 = vsel %vm76, %v75, %v74
    %v87 = vrot.slane %v42, 7
    %v88 = vsel %vm58, %v87, %v41
    %v89 = vrot.slane %v43, 6
    %v90 = vsel %vm61, %v89, %v88
    %v91 = vrot.slane %v44, 5
    %v92 = vsel %vm64, %v91, %v90
    %v93 = vrot.slane %v45, 4
    %v94 = vsel %vm67, %v93, %v92
    %v95 = vrot.slane %v46, 3
    %v96 = vsel %vm70, %v95, %v94
    %v97 = vrot.slane %v47, 2
    %v98 = vsel %vm73, %v97, %v96
    %v99 = vrot.slane %v48, 1
    %v100 = vsel %vm76, %v99, %v98
    %v102 = vld [vmem:[%s1] sm:$0xff]
    %v103 = vld [vmem:[%s1 + $0x8] sm:$0xff]
    %v104 = vld [vmem:[%s1 + $0x10] sm:$0xff]
    %v105 = vld [vmem:[%s1 + $0x18] sm:$0xff]
    %v106 = vld [vmem:[%s2] sm:$0x1]
    %v108 = vperm.slane %v106, 0
    %vm110 = vcmask 261120
    %v111 = vsel %vm110, %v77, 0
    %v113 = vsel %vm110, %v100, 0
    %115 = vmatpush.msra.mxu0 0.0
    %116 = vmatpush.msra.mxu0 0.0
    %117 = vmatpush.msra.mxu0 0.0
    %118 = vmatpush.msra.mxu0 0.0
    %119 = vmatpush.msra.mxu0 0.0
    %120 = vmatpush.msra.mxu0 0.0
    %121 = vmatpush.msra.mxu0 0.0
    %122 = vmatpush.msra.mxu0 0.0
    %123 = vmatpush.msra.mxu0 0.0
    %124 = vmatpush.msra.mxu0 0.0
    %125 = vmatpush.msra.mxu0 0.0
    %126 = vmatpush.msra.mxu0 0.0
    %127 = vmatpush.msra.mxu0 %v105
    %128 = vmatpush.msra.mxu0 %v104
    %129 = vmatpush.msra.mxu0 %v103
    %130 = vmatpush.msra.mxu0 %v102
    %131 = vmatmul.f32.gmra.mxu0 %v111
    %v132 = vpop.f32.mrf.mxu0
    %v133 = vadd.f32 %v108, %v132
    %134 = vmatmul.f32.gmra.mxu0 %v113
    %v135 = vpop.f32.mrf.mxu0
    %v136 = vadd.f32 %v108, %v135
    %137 = vdwg.mxu0
    %v138 = vtanh.pop %v133
    %v139 = vtanh.pop %v136
    %v140 = vld [vmem:[%s3] sm:$0xff]
    %v141 = vld [vmem:[%s3 + $0x8] sm:$0xff]
    %v142 = vld [vmem:[%s3 + $0x10] sm:$0xff]
    %v143 = vld [vmem:[%s3 + $0x18] sm:$0xff]
    %v144 = vld [vmem:[%s3 + $0x20] sm:$0xff]
    %v145 = vld [vmem:[%s3 + $0x28] sm:$0xff]
    %v146 = vld [vmem:[%s3 + $0x30] sm:$0xff]
    %v147 = vld [vmem:[%s3 + $0x38] sm:$0xff]
    %v148 = vld [vmem:[%s3 + $0x40] sm:$0xff]
    %v149 = vld [vmem:[%s3 + $0x48] sm:$0xff]
    %v150 = vld [vmem:[%s3 + $0x50] sm:$0xff]
    %v151 = vld [vmem:[%s3 + $0x58] sm:$0xff]
    %v152 = vld [vmem:[%s3 + $0x60] sm:$0xff]
    %v153 = vld [vmem:[%s3 + $0x68] sm:$0xff]
    %v154 = vld [vmem:[%s3 + $0x70] sm:$0xff]
    %v155 = vld [vmem:[%s3 + $0x78] sm:$0xff]
    %v156 = vld [vmem:[%s4] sm:$0x1]
    %v158 = vperm.slane %v156, 0
    %160 = vmatpush.msra.mxu0 %v155
    %161 = vmatpush.msra.mxu0 %v154
    %162 = vmatpush.msra.mxu0 %v153
    %163 = vmatpush.msra.mxu0 %v152
    %164 = vmatpush.msra.mxu0 %v151
    %165 = vmatpush.msra.mxu0 %v150
    %166 = vmatpush.msra.mxu0 %v149
    %167 = vmatpush.msra.mxu0 %v148
    %168 = vmatpush.msra.mxu0 %v147
    %169 = vmatpush.msra.mxu0 %v146
    %170 = vmatpush.msra.mxu0 %v145
    %171 = vmatpush.msra.mxu0 %v144
    %172 = vmatpush.msra.mxu0 %v143
    %173 = vmatpush.msra.mxu0 %v142
    %174 = vmatpush.msra.mxu0 %v141
    %175 = vmatpush.msra.mxu0 %v140
    %176 = vmatmul.f32.gmra.mxu0 %v138
    %v177 = vpop.f32.mrf.mxu0
    %v178 = vadd.f32 %v158, %v177
    %179 = vmatmul.f32.gmra.mxu0 %v139
    %v180 = vpop.f32.mrf.mxu0
    %v181 = vadd.f32 %v158, %v180
    %182 = vdwg.mxu0
    %vm183 = vcmask 130048
    %v184 = vsel %vm183, %v178, -inf
    %v185 = vrot.slane %v184, 4
    %v186 = vmax.f32 %v184, %v185
    %v187 = vrot.slane %v186, 2
    %v188 = vmax.f32 %v186, %v187
    %v189 = vrot.slane %v188, 1
    %v190 = vmax.f32 %v188, %v189
    %v191 = vsel %vm183, %v181, -inf
    %v192 = vrot.slane %v191, 4
    %v193 = vmax.f32 %v191, %v192
    %v194 = vrot.slane %v193, 2
    %v195 = vmax.f32 %v193, %v194
    %v196 = vrot.slane %v195, 1
    %v197 = vmax.f32 %v195, %v196
    %v198 = vsub.f32 %v178, %v190
    %v199 = vsub.f32 %v181, %v197
    %v200 = vmul.f32 %v198, 1.442695
    %v201 = vpow.pop %v200
    %v202 = vmul.f32 %v199, 1.442695
    %v203 = vpow.pop %v202
    %v204 = vsel %vm183, %v201, 0.0
    %v205 = vrot.slane %v204, 4
    %v206 = vadd.f32 %v204, %v205
    %v207 = vrot.slane %v206, 2
    %v208 = vadd.f32 %v206, %v207
    %v209 = vrot.slane %v208, 1
    %v210 = vadd.f32 %v208, %v209
    %v211 = vsel %vm183, %v203, 0.0
    %v212 = vrot.slane %v211, 4
    %v213 = vadd.f32 %v211, %v212
    %v214 = vrot.slane %v213, 2
    %v215 = vadd.f32 %v213, %v214
    %v216 = vrot.slane %v215, 1
    %v217 = vadd.f32 %v215, %v216
    %v218 = vrcp.pop %v210
    %v219 = vmul.f32 %v210, %v218
    %v220 = vsub.f32 1.0, %v219
    %v221 = vmul.f32 %v218, %v220
    %v222 = vadd.f32 %v218, %v221
    %vm223 = vweird.f32 %v210
    %vm224 = vweird.f32 %v218
    %vm225 = vmor %vm223, %vm224
    %v226 = vsel %vm225, %v218, %v222
    %v227 = vand.u32 2147483647, %v210
    %vm228 = vcmp.eq.f32.partialorder %v227, 8.507059e+37
    %v229 = vand.u32 %v210, 2147483648
    %v230 = vor.u32 1.1754944e-38, %v229
    %v231 = vsel %vm228, %v230, %v226
    %v232 = vmul.f32 %v201, %v231
    %v233 = vrcp.pop %v217
    %v234 = vmul.f32 %v217, %v233
    %v235 = vsub.f32 1.0, %v234
    %v236 = vmul.f32 %v233, %v235
    %v237 = vadd.f32 %v233, %v236
    %vm238 = vweird.f32 %v217
    %vm239 = vweird.f32 %v233
    %vm240 = vmor %vm238, %vm239
    %v241 = vsel %vm240, %v233, %v237
    %v242 = vand.u32 2147483647, %v217
    %vm243 = vcmp.eq.f32.partialorder %v242, 8.507059e+37
    %v244 = vand.u32 %v217, 2147483648
    %v245 = vor.u32 1.1754944e-38, %v244
    %v246 = vsel %vm243, %v245, %v241
    %v247 = vmul.f32 %v203, %v246
    %248 = vxpose.xlu0.b32.start [1/16] %v232, 128
    %249 = vxpose.xlu0.b32.cont [2/16] 0.0, 128
    %250 = vxpose.xlu0.b32.cont [3/16] 0.0, 128
    %251 = vxpose.xlu0.b32.cont [4/16] 0.0, 128
    %252 = vxpose.xlu0.b32.cont [5/16] 0.0, 128
    %253 = vxpose.xlu0.b32.cont [6/16] 0.0, 128
    %254 = vxpose.xlu0.b32.cont [7/16] 0.0, 128
    %255 = vxpose.xlu0.b32.cont [8/16] 0.0, 128
    %256 = vxpose.xlu0.b32.cont [9/16] 0.0, 128
    %257 = vxpose.xlu0.b32.cont [10/16] 0.0, 128
    %258 = vxpose.xlu0.b32.cont [11/16] 0.0, 128
    %259 = vxpose.xlu0.b32.cont [12/16] 0.0, 128
    %260 = vxpose.xlu0.b32.cont [13/16] 0.0, 128
    %261 = vxpose.xlu0.b32.cont [14/16] 0.0, 128
    %262 = vxpose.xlu0.b32.cont [15/16] 0.0, 128
    %263 = vxpose.xlu0.b32.end [16/16] 0.0, 128
    %v264 = vpop.trf.xlu0
    %v265 = vpop.trf.xlu0
    %v266 = vpop.trf.xlu0
    %v267 = vpop.trf.xlu0
    %v268 = vpop.trf.xlu0
    %v269 = vpop.trf.xlu0
    %v270 = vpop.trf.xlu0
    %v271 = vpop.trf.xlu0
    %v272 = vpop.trf.xlu0
    %v273 = vpop.trf.xlu0
    %v274 = vpop.trf.xlu0
    %v275 = vpop.trf.xlu0
    %v276 = vpop.trf.xlu0
    %v277 = vpop.trf.xlu0
    %v278 = vpop.trf.xlu0
    %v279 = vpop.trf.xlu0
    %280 = vxpose.xlu0.b32.start [1/16] %v247, 128
    %281 = vxpose.xlu0.b32.cont [2/16] 0.0, 128
    %282 = vxpose.xlu0.b32.cont [3/16] 0.0, 128
    %283 = vxpose.xlu0.b32.cont [4/16] 0.0, 128
    %284 = vxpose.xlu0.b32.cont [5/16] 0.0, 128
    %285 = vxpose.xlu0.b32.cont [6/16] 0.0, 128
    %286 = vxpose.xlu0.b32.cont [7/16] 0.0, 128
    %287 = vxpose.xlu0.b32.cont [8/16] 0.0, 128
    %288 = vxpose.xlu0.b32.cont [9/16] 0.0, 128
    %289 = vxpose.xlu0.b32.cont [10/16] 0.0, 128
    %290 = vxpose.xlu0.b32.cont [11/16] 0.0, 128
    %291 = vxpose.xlu0.b32.cont [12/16] 0.0, 128
    %292 = vxpose.xlu0.b32.cont [13/16] 0.0, 128
    %293 = vxpose.xlu0.b32.cont [14/16] 0.0, 128
    %294 = vxpose.xlu0.b32.cont [15/16] 0.0, 128
    %295 = vxpose.xlu0.b32.end [16/16] 0.0, 128
    %v296 = vpop.trf.xlu0
    %v297 = vpop.trf.xlu0
    %v298 = vpop.trf.xlu0
    %v299 = vpop.trf.xlu0
    %v300 = vpop.trf.xlu0
    %v301 = vpop.trf.xlu0
    %v302 = vpop.trf.xlu0
    %v303 = vpop.trf.xlu0
    %v304 = vpop.trf.xlu0
    %v305 = vpop.trf.xlu0
    %v306 = vpop.trf.xlu0
    %v307 = vpop.trf.xlu0
    %v308 = vpop.trf.xlu0
    %v309 = vpop.trf.xlu0
    %v310 = vpop.trf.xlu0
    %v311 = vpop.trf.xlu0
    %vm312 = vcmask 64512
    %v314 = vsel %vm312, %v264, 0
    %v317 = vsel %vm312, %v265, 0
    %319 = vmatpush.msra.mxu0 0.0
    %320 = vmatpush.msra.mxu0 0.0
    %321 = vmatpush.msra.mxu0 0.0
    %322 = vmatpush.msra.mxu0 0.0
    %323 = vmatpush.msra.mxu0 0.0
    %324 = vmatpush.msra.mxu0 0.0
    %325 = vmatpush.msra.mxu0 0.0
    %326 = vmatpush.msra.mxu0 0.0
    %327 = vmatpush.msra.mxu0 0.0
    %328 = vmatpush.msra.mxu0 0.0
    %329 = vmatpush.msra.mxu0 0.0
    %330 = vmatpush.msra.mxu0 0.0
    %331 = vmatpush.msra.mxu0 0.0
    %332 = vmatpush.msra.mxu0 0.0
    %333 = vmatpush.msra.mxu0 0.0
    %334 = vmatpush.msra.mxu0 %v77
    %335 = vmatmul.f32.gmra.mxu0 %v314
    %v336 = vpop.f32.mrf.mxu0
    %v337 = vadd.f32 0.0, %v336
    %338 = vmatmul.f32.gmra.mxu0 %v317
    %v339 = vpop.f32.mrf.mxu0
    %v340 = vadd.f32 0.0, %v339
    %341 = vdwg.mxu0
    %v343 = vsel %vm312, %v296, 0
    %v346 = vsel %vm312, %v297, 0
    %348 = vmatpush.msra.mxu0 0.0
    %349 = vmatpush.msra.mxu0 0.0
    %350 = vmatpush.msra.mxu0 0.0
    %351 = vmatpush.msra.mxu0 0.0
    %352 = vmatpush.msra.mxu0 0.0
    %353 = vmatpush.msra.mxu0 0.0
    %354 = vmatpush.msra.mxu0 0.0
    %355 = vmatpush.msra.mxu0 0.0
    %356 = vmatpush.msra.mxu0 0.0
    %357 = vmatpush.msra.mxu0 0.0
    %358 = vmatpush.msra.mxu0 0.0
    %359 = vmatpush.msra.mxu0 0.0
    %360 = vmatpush.msra.mxu0 0.0
    %361 = vmatpush.msra.mxu0 0.0
    %362 = vmatpush.msra.mxu0 0.0
    %363 = vmatpush.msra.mxu0 %v100
    %364 = vmatmul.f32.gmra.mxu0 %v343
    %v365 = vpop.f32.mrf.mxu0
    %v366 = vadd.f32 0.0, %v365
    %367 = vmatmul.f32.gmra.mxu0 %v346
    %v368 = vpop.f32.mrf.mxu0
    %v369 = vadd.f32 0.0, %v368
    %370 = vdwg.mxu0
    %v371 = vrot.slane %v337, 4
    %vm372 = vcmask 1047556
    %v373 = vsel %vm372, 0.0, %v371
    %v375 = vunpack.c.l.s4 1983009808
    %v376 = vunpack.c.0.s8 %v375
    %v377 = vperm.slane %v337, %v376
    %v379 = vunpack.c.l.s4 1983009808
    %v380 = vunpack.c.0.s8 %v379
    %v381 = vperm.slane %v373, %v380
    %v382 = vrot.slane %v366, 4
    %v383 = vsel %vm372, 0.0, %v382
    %v385 = vunpack.c.l.s4 1983009808
    %v386 = vunpack.c.0.s8 %v385
    %v387 = vperm.slane %v366, %v386
    %v389 = vunpack.c.l.s4 1983009808
    %v390 = vunpack.c.0.s8 %v389
    %v391 = vperm.slane %v383, %v390
    %v392 = vrot.slane %v387, 4
    %v393 = vsel %vm372, %v392, %v377
    %v394 = vrot.slane %v377, 4
    %v395 = vsel %vm372, %v387, %v394
    %v397 = vunpack.c.l.s4 1934713408
    %v398 = vunpack.c.0.s8 %v397
    %v399 = vperm.slane %v393, %v398
    %v401 = vunpack.c.l.s4 1934713408
    %v402 = vunpack.c.0.s8 %v401
    %v403 = vperm.slane %v395, %v402
    %v404 = vrot.slane %v391, 4
    %v405 = vsel %vm372, %v404, %v381
    %v406 = vrot.slane %v381, 4
    %v407 = vsel %vm372, %v391, %v406
    %v409 = vunpack.c.l.s4 1934713408
    %v410 = vunpack.c.0.s8 %v409
    %v411 = vperm.slane %v405, %v410
    %v413 = vunpack.c.l.s4 1934713408
    %v414 = vunpack.c.0.s8 %v413
    %v415 = vperm.slane %v407, %v414
    %v416 = vrot.slane %v399, 4
    %v417 = vsel %vm372, 0.0, %v416
    %v418 = vrot.slane %v403, 4
    %v419 = vsel %vm372, 0.0, %v418
    %v420 = vrot.slane %v411, 4
    %v421 = vsel %vm372, 0.0, %v420
    %v422 = vrot.slane %v415, 4
    %v423 = vsel %vm372, 0.0, %v422
    %v424 = vrot.slane %v340, 4
    %v425 = vsel %vm372, 0.0, %v424
    %v427 = vunpack.c.l.s4 1983009808
    %v428 = vunpack.c.0.s8 %v427
    %v429 = vperm.slane %v340, %v428
    %v431 = vunpack.c.l.s4 1983009808
    %v432 = vunpack.c.0.s8 %v431
    %v433 = vperm.slane %v425, %v432
    %v434 = vrot.slane %v369, 4
    %v435 = vsel %vm372, 0.0, %v434
    %v437 = vunpack.c.l.s4 1983009808
    %v438 = vunpack.c.0.s8 %v437
    %v439 = vperm.slane %v369, %v438
    %v441 = vunpack.c.l.s4 1983009808
    %v442 = vunpack.c.0.s8 %v441
    %v443 = vperm.slane %v435, %v442
    %v444 = vrot.slane %v439, 4
    %v445 = vsel %vm372, %v444, %v429
    %v446 = vrot.slane %v429, 4
    %v447 = vsel %vm372, %v439, %v446
    %v449 = vunpack.c.l.s4 1934713408
    %v450 = vunpack.c.0.s8 %v449
    %v451 = vperm.slane %v445, %v450
    %v453 = vunpack.c.l.s4 1934713408
    %v454 = vunpack.c.0.s8 %v453
    %v455 = vperm.slane %v447, %v454
    %v456 = vrot.slane %v443, 4
    %v457 = vsel %vm372, %v456, %v433
    %v458 = vrot.slane %v433, 4
    %v459 = vsel %vm372, %v443, %v458
    %v461 = vunpack.c.l.s4 1934713408
    %v462 = vunpack.c.0.s8 %v461
    %v463 = vperm.slane %v457, %v462
    %v465 = vunpack.c.l.s4 1934713408
    %v466 = vunpack.c.0.s8 %v465
    %v467 = vperm.slane %v459, %v466
    %v468 = vrot.slane %v451, 4
    %v469 = vsel %vm372, 0.0, %v468
    %v470 = vrot.slane %v455, 4
    %v471 = vsel %vm372, 0.0, %v470
    %v472 = vrot.slane %v463, 4
    %v473 = vsel %vm372, 0.0, %v472
    %v474 = vrot.slane %v467, 4
    %v475 = vsel %vm372, 0.0, %v474
    %v476 = vld [vmem:[%s5] sm:$0xff]
    %v477 = vld [vmem:[%s5 + $0x8] sm:$0xff]
    %v478 = vld [vmem:[%s5 + $0x10] sm:$0xff]
    %v479 = vld [vmem:[%s5 + $0x18] sm:$0xff]
    %v480 = vld [vmem:[%s5 + $0x20] sm:$0xff]
    %v481 = vld [vmem:[%s5 + $0x28] sm:$0xff]
    %v482 = vld [vmem:[%s5 + $0x30] sm:$0xff]
    %v483 = vld [vmem:[%s5 + $0x38] sm:$0xff]
    %v484 = vld [vmem:[%s5 + $0x40] sm:$0xff]
    %v485 = vld [vmem:[%s5 + $0x48] sm:$0xff]
    %v486 = vld [vmem:[%s5 + $0x50] sm:$0xff]
    %v487 = vld [vmem:[%s5 + $0x58] sm:$0xff]
    %v488 = vld [vmem:[%s5 + $0x60] sm:$0xff]
    %v489 = vld [vmem:[%s5 + $0x68] sm:$0xff]
    %v490 = vld [vmem:[%s5 + $0x70] sm:$0xff]
    %v491 = vld [vmem:[%s5 + $0x78] sm:$0xff]
    %v492 = vld [vmem:[%s5 + $0x80] sm:$0xff]
    %v493 = vld [vmem:[%s5 + $0x88] sm:$0xff]
    %v494 = vld [vmem:[%s5 + $0x90] sm:$0xff]
    %v495 = vld [vmem:[%s5 + $0x98] sm:$0xff]
    %v496 = vld [vmem:[%s5 + $0xa0] sm:$0xff]
    %v497 = vld [vmem:[%s5 + $0xa8] sm:$0xff]
    %v498 = vld [vmem:[%s5 + $0xb0] sm:$0xff]
    %v499 = vld [vmem:[%s5 + $0xb8] sm:$0xff]
    %v500 = vld [vmem:[%s5 + $0xc0] sm:$0xff]
    %v501 = vld [vmem:[%s5 + $0xc8] sm:$0xff]
    %v502 = vld [vmem:[%s5 + $0xd0] sm:$0xff]
    %v503 = vld [vmem:[%s5 + $0xd8] sm:$0xff]
    %v504 = vld [vmem:[%s5 + $0xe0] sm:$0xff]
    %v505 = vld [vmem:[%s5 + $0xe8] sm:$0xff]
    %v506 = vld [vmem:[%s5 + $0xf0] sm:$0xff]
    %v507 = vld [vmem:[%s5 + $0xf8] sm:$0xff]
    %v508 = vld [vmem:[%s5 + $0x100] sm:$0xff]
    %v509 = vld [vmem:[%s5 + $0x108] sm:$0xff]
    %v510 = vld [vmem:[%s5 + $0x110] sm:$0xff]
    %v511 = vld [vmem:[%s5 + $0x118] sm:$0xff]
    %v512 = vld [vmem:[%s5 + $0x120] sm:$0xff]
    %v513 = vld [vmem:[%s5 + $0x128] sm:$0xff]
    %v514 = vld [vmem:[%s5 + $0x130] sm:$0xff]
    %v515 = vld [vmem:[%s5 + $0x138] sm:$0xff]
    %v516 = vld [vmem:[%s5 + $0x140] sm:$0xff]
    %v517 = vld [vmem:[%s5 + $0x148] sm:$0xff]
    %v518 = vld [vmem:[%s5 + $0x150] sm:$0xff]
    %v519 = vld [vmem:[%s5 + $0x158] sm:$0xff]
    %v520 = vld [vmem:[%s5 + $0x160] sm:$0xff]
    %v521 = vld [vmem:[%s5 + $0x168] sm:$0xff]
    %v522 = vld [vmem:[%s5 + $0x170] sm:$0xff]
    %v523 = vld [vmem:[%s5 + $0x178] sm:$0xff]
    %v524 = vld [vmem:[%s5 + $0x180] sm:$0xff]
    %v525 = vld [vmem:[%s5 + $0x188] sm:$0xff]
    %v526 = vld [vmem:[%s5 + $0x190] sm:$0xff]
    %v527 = vld [vmem:[%s5 + $0x198] sm:$0xff]
    %v528 = vld [vmem:[%s5 + $0x1a0] sm:$0xff]
    %v529 = vld [vmem:[%s5 + $0x1a8] sm:$0xff]
    %v530 = vld [vmem:[%s5 + $0x1b0] sm:$0xff]
    %v531 = vld [vmem:[%s5 + $0x1b8] sm:$0xff]
    %v532 = vld [vmem:[%s5 + $0x1c0] sm:$0xff]
    %v533 = vld [vmem:[%s5 + $0x1c8] sm:$0xff]
    %v534 = vld [vmem:[%s5 + $0x1d0] sm:$0xff]
    %v535 = vld [vmem:[%s5 + $0x1d8] sm:$0xff]
    %v536 = vld [vmem:[%s5 + $0x1e0] sm:$0xff]
    %v537 = vld [vmem:[%s5 + $0x1e8] sm:$0xff]
    %v538 = vld [vmem:[%s5 + $0x1f0] sm:$0xff]
    %v539 = vld [vmem:[%s5 + $0x1f8] sm:$0xff]
    %v541 = vsel %vm110, %v399, 0
    %543 = vmatpush.msra.mxu0 0.0
    %544 = vmatpush.msra.mxu0 0.0
    %545 = vmatpush.msra.mxu0 0.0
    %546 = vmatpush.msra.mxu0 0.0
    %547 = vmatpush.msra.mxu0 0.0
    %548 = vmatpush.msra.mxu0 0.0
    %549 = vmatpush.msra.mxu0 0.0
    %550 = vmatpush.msra.mxu0 0.0
    %551 = vmatpush.msra.mxu0 0.0
    %552 = vmatpush.msra.mxu0 0.0
    %553 = vmatpush.msra.mxu0 0.0
    %554 = vmatpush.msra.mxu0 0.0
    %555 = vmatpush.msra.mxu0 %v479
    %556 = vmatpush.msra.mxu0 %v478
    %557 = vmatpush.msra.mxu0 %v477
    %558 = vmatpush.msra.mxu0 %v476
    %559 = vmatmul.f32.gmra.mxu0 %v541
    %v560 = vpop.f32.mrf.mxu0
    %v561 = vadd.f32 0.0, %v560
    %562 = vdwg.mxu0
    %v564 = vsel %vm110, %v417, 0
    %566 = vmatpush.msra.mxu0 0.0
    %567 = vmatpush.msra.mxu0 0.0
    %568 = vmatpush.msra.mxu0 0.0
    %569 = vmatpush.msra.mxu0 0.0
    %570 = vmatpush.msra.mxu0 0.0
    %571 = vmatpush.msra.mxu0 0.0
    %572 = vmatpush.msra.mxu0 0.0
    %573 = vmatpush.msra.mxu0 0.0
    %574 = vmatpush.msra.mxu0 0.0
    %575 = vmatpush.msra.mxu0 0.0
    %576 = vmatpush.msra.mxu0 0.0
    %577 = vmatpush.msra.mxu0 0.0
    %578 = vmatpush.msra.mxu0 %v483
    %579 = vmatpush.msra.mxu0 %v482
    %580 = vmatpush.msra.mxu0 %v481
    %581 = vmatpush.msra.mxu0 %v480
    %582 = vmatmul.f32.gmra.mxu0 %v564
    %v583 = vpop.f32.mrf.mxu0
    %v584 = vadd.f32 0.0, %v583
    %585 = vdwg.mxu0
    %v587 = vsel %vm110, %v403, 0
    %589 = vmatpush.msra.mxu0 0.0
    %590 = vmatpush.msra.mxu0 0.0
    %591 = vmatpush.msra.mxu0 0.0
    %592 = vmatpush.msra.mxu0 0.0
    %593 = vmatpush.msra.mxu0 0.0
    %594 = vmatpush.msra.mxu0 0.0
    %595 = vmatpush.msra.mxu0 0.0
    %596 = vmatpush.msra.mxu0 0.0
    %597 = vmatpush.msra.mxu0 0.0
    %598 = vmatpush.msra.mxu0 0.0
    %599 = vmatpush.msra.mxu0 0.0
    %600 = vmatpush.msra.mxu0 0.0
    %601 = vmatpush.msra.mxu0 %v487
    %602 = vmatpush.msra.mxu0 %v486
    %603 = vmatpush.msra.mxu0 %v485
    %604 = vmatpush.msra.mxu0 %v484
    %605 = vmatmul.f32.gmra.mxu0 %v587
    %v606 = vpop.f32.mrf.mxu0
    %v607 = vadd.f32 0.0, %v606
    %608 = vdwg.mxu0
    %v610 = vsel %vm110, %v419, 0
    %612 = vmatpush.msra.mxu0 0.0
    %613 = vmatpush.msra.mxu0 0.0
    %614 = vmatpush.msra.mxu0 0.0
    %615 = vmatpush.msra.mxu0 0.0
    %616 = vmatpush.msra.mxu0 0.0
    %617 = vmatpush.msra.mxu0 0.0
    %618 = vmatpush.msra.mxu0 0.0
    %619 = vmatpush.msra.mxu0 0.0
    %620 = vmatpush.msra.mxu0 0.0
    %621 = vmatpush.msra.mxu0 0.0
    %622 = vmatpush.msra.mxu0 0.0
    %623 = vmatpush.msra.mxu0 0.0
    %624 = vmatpush.msra.mxu0 %v491
    %625 = vmatpush.msra.mxu0 %v490
    %626 = vmatpush.msra.mxu0 %v489
    %627 = vmatpush.msra.mxu0 %v488
    %628 = vmatmul.f32.gmra.mxu0 %v610
    %v629 = vpop.f32.mrf.mxu0
    %v630 = vadd.f32 0.0, %v629
    %631 = vdwg.mxu0
    %v633 = vsel %vm110, %v411, 0
    %635 = vmatpush.msra.mxu0 0.0
    %636 = vmatpush.msra.mxu0 0.0
    %637 = vmatpush.msra.mxu0 0.0
    %638 = vmatpush.msra.mxu0 0.0
    %639 = vmatpush.msra.mxu0 0.0
    %640 = vmatpush.msra.mxu0 0.0
    %641 = vmatpush.msra.mxu0 0.0
    %642 = vmatpush.msra.mxu0 0.0
    %643 = vmatpush.msra.mxu0 0.0
    %644 = vmatpush.msra.mxu0 0.0
    %645 = vmatpush.msra.mxu0 0.0
    %646 = vmatpush.msra.mxu0 0.0
    %647 = vmatpush.msra.mxu0 %v495
    %648 = vmatpush.msra.mxu0 %v494
    %649 = vmatpush.msra.mxu0 %v493
    %650 = vmatpush.msra.mxu0 %v492
    %651 = vmatmul.f32.gmra.mxu0 %v633
    %v652 = vpop.f32.mrf.mxu0
    %v653 = vadd.f32 0.0, %v652
    %654 = vdwg.mxu0
    %v656 = vsel %vm110, %v421, 0
    %658 = vmatpush.msra.mxu0 0.0
    %659 = vmatpush.msra.mxu0 0.0
    %660 = vmatpush.msra.mxu0 0.0
    %661 = vmatpush.msra.mxu0 0.0
    %662 = vmatpush.msra.mxu0 0.0
    %663 = vmatpush.msra.mxu0 0.0
    %664 = vmatpush.msra.mxu0 0.0
    %665 = vmatpush.msra.mxu0 0.0
    %666 = vmatpush.msra.mxu0 0.0
    %667 = vmatpush.msra.mxu0 0.0
    %668 = vmatpush.msra.mxu0 0.0
    %669 = vmatpush.msra.mxu0 0.0
    %670 = vmatpush.msra.mxu0 %v499
    %671 = vmatpush.msra.mxu0 %v498
    %672 = vmatpush.msra.mxu0 %v497
    %673 = vmatpush.msra.mxu0 %v496
    %674 = vmatmul.f32.gmra.mxu0 %v656
    %v675 = vpop.f32.mrf.mxu0
    %v676 = vadd.f32 0.0, %v675
    %677 = vdwg.mxu0
    %v679 = vsel %vm110, %v415, 0
    %681 = vmatpush.msra.mxu0 0.0
    %682 = vmatpush.msra.mxu0 0.0
    %683 = vmatpush.msra.mxu0 0.0
    %684 = vmatpush.msra.mxu0 0.0
    %685 = vmatpush.msra.mxu0 0.0
    %686 = vmatpush.msra.mxu0 0.0
    %687 = vmatpush.msra.mxu0 0.0
    %688 = vmatpush.msra.mxu0 0.0
    %689 = vmatpush.msra.mxu0 0.0
    %690 = vmatpush.msra.mxu0 0.0
    %691 = vmatpush.msra.mxu0 0.0
    %692 = vmatpush.msra.mxu0 0.0
    %693 = vmatpush.msra.mxu0 %v503
    %694 = vmatpush.msra.mxu0 %v502
    %695 = vmatpush.msra.mxu0 %v501
    %696 = vmatpush.msra.mxu0 %v500
    %697 = vmatmul.f32.gmra.mxu0 %v679
    %v698 = vpop.f32.mrf.mxu0
    %v699 = vadd.f32 0.0, %v698
    %700 = vdwg.mxu0
    %v702 = vsel %vm110, %v423, 0
    %704 = vmatpush.msra.mxu0 0.0
    %705 = vmatpush.msra.mxu0 0.0
    %706 = vmatpush.msra.mxu0 0.0
    %707 = vmatpush.msra.mxu0 0.0
    %708 = vmatpush.msra.mxu0 0.0
    %709 = vmatpush.msra.mxu0 0.0
    %710 = vmatpush.msra.mxu0 0.0
    %711 = vmatpush.msra.mxu0 0.0
    %712 = vmatpush.msra.mxu0 0.0
    %713 = vmatpush.msra.mxu0 0.0
    %714 = vmatpush.msra.mxu0 0.0
    %715 = vmatpush.msra.mxu0 0.0
    %716 = vmatpush.msra.mxu0 %v507
    %717 = vmatpush.msra.mxu0 %v506
    %718 = vmatpush.msra.mxu0 %v505
    %719 = vmatpush.msra.mxu0 %v504
    %720 = vmatmul.f32.gmra.mxu0 %v702
    %v721 = vpop.f32.mrf.mxu0
    %v722 = vadd.f32 0.0, %v721
    %723 = vdwg.mxu0
    %v725 = vsel %vm110, %v451, 0
    %727 = vmatpush.msra.mxu0 0.0
    %728 = vmatpush.msra.mxu0 0.0
    %729 = vmatpush.msra.mxu0 0.0
    %730 = vmatpush.msra.mxu0 0.0
    %731 = vmatpush.msra.mxu0 0.0
    %732 = vmatpush.msra.mxu0 0.0
    %733 = vmatpush.msra.mxu0 0.0
    %734 = vmatpush.msra.mxu0 0.0
    %735 = vmatpush.msra.mxu0 0.0
    %736 = vmatpush.msra.mxu0 0.0
    %737 = vmatpush.msra.mxu0 0.0
    %738 = vmatpush.msra.mxu0 0.0
    %739 = vmatpush.msra.mxu0 %v511
    %740 = vmatpush.msra.mxu0 %v510
    %741 = vmatpush.msra.mxu0 %v509
    %742 = vmatpush.msra.mxu0 %v508
    %743 = vmatmul.f32.gmra.mxu0 %v725
    %v744 = vpop.f32.mrf.mxu0
    %v745 = vadd.f32 0.0, %v744
    %746 = vdwg.mxu0
    %v748 = vsel %vm110, %v469, 0
    %750 = vmatpush.msra.mxu0 0.0
    %751 = vmatpush.msra.mxu0 0.0
    %752 = vmatpush.msra.mxu0 0.0
    %753 = vmatpush.msra.mxu0 0.0
    %754 = vmatpush.msra.mxu0 0.0
    %755 = vmatpush.msra.mxu0 0.0
    %756 = vmatpush.msra.mxu0 0.0
    %757 = vmatpush.msra.mxu0 0.0
    %758 = vmatpush.msra.mxu0 0.0
    %759 = vmatpush.msra.mxu0 0.0
    %760 = vmatpush.msra.mxu0 0.0
    %761 = vmatpush.msra.mxu0 0.0
    %762 = vmatpush.msra.mxu0 %v515
    %763 = vmatpush.msra.mxu0 %v514
    %764 = vmatpush.msra.mxu0 %v513
    %765 = vmatpush.msra.mxu0 %v512
    %766 = vmatmul.f32.gmra.mxu0 %v748
    %v767 = vpop.f32.mrf.mxu0
    %v768 = vadd.f32 0.0, %v767
    %769 = vdwg.mxu0
    %v771 = vsel %vm110, %v455, 0
    %773 = vmatpush.msra.mxu0 0.0
    %774 = vmatpush.msra.mxu0 0.0
    %775 = vmatpush.msra.mxu0 0.0
    %776 = vmatpush.msra.mxu0 0.0
    %777 = vmatpush.msra.mxu0 0.0
    %778 = vmatpush.msra.mxu0 0.0
    %779 = vmatpush.msra.mxu0 0.0
    %780 = vmatpush.msra.mxu0 0.0
    %781 = vmatpush.msra.mxu0 0.0
    %782 = vmatpush.msra.mxu0 0.0
    %783 = vmatpush.msra.mxu0 0.0
    %784 = vmatpush.msra.mxu0 0.0
    %785 = vmatpush.msra.mxu0 %v519
    %786 = vmatpush.msra.mxu0 %v518
    %787 = vmatpush.msra.mxu0 %v517
    %788 = vmatpush.msra.mxu0 %v516
    %789 = vmatmul.f32.gmra.mxu0 %v771
    %v790 = vpop.f32.mrf.mxu0
    %v791 = vadd.f32 0.0, %v790
    %792 = vdwg.mxu0
    %v794 = vsel %vm110, %v471, 0
    %796 = vmatpush.msra.mxu0 0.0
    %797 = vmatpush.msra.mxu0 0.0
    %798 = vmatpush.msra.mxu0 0.0
    %799 = vmatpush.msra.mxu0 0.0
    %800 = vmatpush.msra.mxu0 0.0
    %801 = vmatpush.msra.mxu0 0.0
    %802 = vmatpush.msra.mxu0 0.0
    %803 = vmatpush.msra.mxu0 0.0
    %804 = vmatpush.msra.mxu0 0.0
    %805 = vmatpush.msra.mxu0 0.0
    %806 = vmatpush.msra.mxu0 0.0
    %807 = vmatpush.msra.mxu0 0.0
    %808 = vmatpush.msra.mxu0 %v523
    %809 = vmatpush.msra.mxu0 %v522
    %810 = vmatpush.msra.mxu0 %v521
    %811 = vmatpush.msra.mxu0 %v520
    %812 = vmatmul.f32.gmra.mxu0 %v794
    %v813 = vpop.f32.mrf.mxu0
    %v814 = vadd.f32 0.0, %v813
    %815 = vdwg.mxu0
    %v817 = vsel %vm110, %v463, 0
    %819 = vmatpush.msra.mxu0 0.0
    %820 = vmatpush.msra.mxu0 0.0
    %821 = vmatpush.msra.mxu0 0.0
    %822 = vmatpush.msra.mxu0 0.0
    %823 = vmatpush.msra.mxu0 0.0
    %824 = vmatpush.msra.mxu0 0.0
    %825 = vmatpush.msra.mxu0 0.0
    %826 = vmatpush.msra.mxu0 0.0
    %827 = vmatpush.msra.mxu0 0.0
    %828 = vmatpush.msra.mxu0 0.0
    %829 = vmatpush.msra.mxu0 0.0
    %830 = vmatpush.msra.mxu0 0.0
    %831 = vmatpush.msra.mxu0 %v527
    %832 = vmatpush.msra.mxu0 %v526
    %833 = vmatpush.msra.mxu0 %v525
    %834 = vmatpush.msra.mxu0 %v524
    %835 = vmatmul.f32.gmra.mxu0 %v817
    %v836 = vpop.f32.mrf.mxu0
    %v837 = vadd.f32 0.0, %v836
    %838 = vdwg.mxu0
    %v840 = vsel %vm110, %v473, 0
    %842 = vmatpush.msra.mxu0 0.0
    %843 = vmatpush.msra.mxu0 0.0
    %844 = vmatpush.msra.mxu0 0.0
    %845 = vmatpush.msra.mxu0 0.0
    %846 = vmatpush.msra.mxu0 0.0
    %847 = vmatpush.msra.mxu0 0.0
    %848 = vmatpush.msra.mxu0 0.0
    %849 = vmatpush.msra.mxu0 0.0
    %850 = vmatpush.msra.mxu0 0.0
    %851 = vmatpush.msra.mxu0 0.0
    %852 = vmatpush.msra.mxu0 0.0
    %853 = vmatpush.msra.mxu0 0.0
    %854 = vmatpush.msra.mxu0 %v531
    %855 = vmatpush.msra.mxu0 %v530
    %856 = vmatpush.msra.mxu0 %v529
    %857 = vmatpush.msra.mxu0 %v528
    %858 = vmatmul.f32.gmra.mxu0 %v840
    %v859 = vpop.f32.mrf.mxu0
    %v860 = vadd.f32 0.0, %v859
    %861 = vdwg.mxu0
    %v863 = vsel %vm110, %v467, 0
    %865 = vmatpush.msra.mxu0 0.0
    %866 = vmatpush.msra.mxu0 0.0
    %867 = vmatpush.msra.mxu0 0.0
    %868 = vmatpush.msra.mxu0 0.0
    %869 = vmatpush.msra.mxu0 0.0
    %870 = vmatpush.msra.mxu0 0.0
    %871 = vmatpush.msra.mxu0 0.0
    %872 = vmatpush.msra.mxu0 0.0
    %873 = vmatpush.msra.mxu0 0.0
    %874 = vmatpush.msra.mxu0 0.0
    %875 = vmatpush.msra.mxu0 0.0
    %876 = vmatpush.msra.mxu0 0.0
    %877 = vmatpush.msra.mxu0 %v535
    %878 = vmatpush.msra.mxu0 %v534
    %879 = vmatpush.msra.mxu0 %v533
    %880 = vmatpush.msra.mxu0 %v532
    %881 = vmatmul.f32.gmra.mxu0 %v863
    %v882 = vpop.f32.mrf.mxu0
    %v883 = vadd.f32 0.0, %v882
    %884 = vdwg.mxu0
    %v886 = vsel %vm110, %v475, 0
    %888 = vmatpush.msra.mxu0 0.0
    %889 = vmatpush.msra.mxu0 0.0
    %890 = vmatpush.msra.mxu0 0.0
    %891 = vmatpush.msra.mxu0 0.0
    %892 = vmatpush.msra.mxu0 0.0
    %893 = vmatpush.msra.mxu0 0.0
    %894 = vmatpush.msra.mxu0 0.0
    %895 = vmatpush.msra.mxu0 0.0
    %896 = vmatpush.msra.mxu0 0.0
    %897 = vmatpush.msra.mxu0 0.0
    %898 = vmatpush.msra.mxu0 0.0
    %899 = vmatpush.msra.mxu0 0.0
    %900 = vmatpush.msra.mxu0 %v539
    %901 = vmatpush.msra.mxu0 %v538
    %902 = vmatpush.msra.mxu0 %v537
    %903 = vmatpush.msra.mxu0 %v536
    %904 = vmatmul.f32.gmra.mxu0 %v886
    %v905 = vpop.f32.mrf.mxu0
    %v906 = vadd.f32 0.0, %v905
    %907 = vdwg.mxu0
    %vm908 = vcmask 1041408
    %v909 = vsel %vm908, %v561, 0.0
    %v910 = vsel %vm908, %v584, 0.0
    %v911 = vadd.f32 %v909, %v910
    %v912 = vsel %vm908, %v607, 0.0
    %v913 = vadd.f32 %v911, %v912
    %v914 = vsel %vm908, %v630, 0.0
    %v915 = vadd.f32 %v913, %v914
    %v916 = vsel %vm908, %v653, 0.0
    %v917 = vadd.f32 %v915, %v916
    %v918 = vsel %vm908, %v676, 0.0
    %v919 = vadd.f32 %v917, %v918
    %v920 = vsel %vm908, %v699, 0.0
    %v921 = vadd.f32 %v919, %v920
    %v922 = vsel %vm908, %v722, 0.0
    %v923 = vadd.f32 %v921, %v922
    %v924 = vsel %vm908, %v745, 0.0
    %v925 = vadd.f32 %v923, %v924
    %v926 = vsel %vm908, %v768, 0.0
    %v927 = vadd.f32 %v925, %v926
    %v928 = vsel %vm908, %v791, 0.0
    %v929 = vadd.f32 %v927, %v928
    %v930 = vsel %vm908, %v814, 0.0
    %v931 = vadd.f32 %v929, %v930
    %v932 = vsel %vm908, %v837, 0.0
    %v933 = vadd.f32 %v931, %v932
    %v934 = vsel %vm908, %v860, 0.0
    %v935 = vadd.f32 %v933, %v934
    %v936 = vsel %vm908, %v883, 0.0
    %v937 = vadd.f32 %v935, %v936
    %v938 = vsel %vm908, %v906, 0.0
    %v939 = vadd.f32 %v937, %v938
    %v940 = vld [vmem:[%s6] sm:$0x1]
    %v942 = vperm.slane %v940, 0
    %v944 = vadd.f32 %v939, %v942
    %v945 = vld [vmem:[%s7] sm:$0xff]
    %v946 = vld [vmem:[%s7 + $0x8] sm:$0xff]
    %v947 = vld [vmem:[%s7 + $0x10] sm:$0xff]
    %v948 = vld [vmem:[%s7 + $0x18] sm:$0xff]
    %v949 = vld [vmem:[%s7 + $0x20] sm:$0xff]
    %v950 = vld [vmem:[%s7 + $0x28] sm:$0xff]
    %v951 = vld [vmem:[%s7 + $0x30] sm:$0xff]
    %v952 = vld [vmem:[%s7 + $0x38] sm:$0xff]
    %v953 = vld [vmem:[%s7 + $0x40] sm:$0xff]
    %v954 = vld [vmem:[%s7 + $0x48] sm:$0xff]
    %v955 = vld [vmem:[%s7 + $0x50] sm:$0xff]
    %v956 = vld [vmem:[%s7 + $0x58] sm:$0xff]
    %v957 = vld [vmem:[%s7 + $0x60] sm:$0xff]
    %v958 = vld [vmem:[%s7 + $0x68] sm:$0xff]
    %v959 = vld [vmem:[%s7 + $0x70] sm:$0xff]
    %v960 = vld [vmem:[%s7 + $0x78] sm:$0xff]
    %v961 = vld [vmem:[%s8] sm:$0x1]
    %v963 = vperm.slane %v961, 0
    %965 = vmatpush.msra.mxu0 %v960
    %966 = vmatpush.msra.mxu0 %v959
    %967 = vmatpush.msra.mxu0 %v958
    %968 = vmatpush.msra.mxu0 %v957
    %969 = vmatpush.msra.mxu0 %v956
    %970 = vmatpush.msra.mxu0 %v955
    %971 = vmatpush.msra.mxu0 %v954
    %972 = vmatpush.msra.mxu0 %v953
    %973 = vmatpush.msra.mxu0 %v952
    %974 = vmatpush.msra.mxu0 %v951
    %975 = vmatpush.msra.mxu0 %v950
    %976 = vmatpush.msra.mxu0 %v949
    %977 = vmatpush.msra.mxu0 %v948
    %978 = vmatpush.msra.mxu0 %v947
    %979 = vmatpush.msra.mxu0 %v946
    %980 = vmatpush.msra.mxu0 %v945
    %981 = vmatmul.f32.gmra.mxu0 %v944
    %v982 = vpop.f32.mrf.mxu0
    %v983 = vadd.f32 %v963, %v982
    %984 = vdwg.mxu0
    %985 = vst [vmem:[#allocation2] sm:$0x3] %v983
    // Predicated region
    $region38: #{classifier_lstm_forward.1} parent=1 // pred_check
      _
    $region39: #{classifier_lstm_forward.1} parent=1 // pred_check_branch
      %987 = sbr.rel (0) target = $region41
    $region40: #{classifier_lstm_forward.1} parent=1 // pred_region
      %989 = vsyncadd [#allocation3], 0
      %s991 = sshll.u32 [#allocation2], 4
      %s992 = int_to_ptr.vmem [resolvable:$true] %s991
      %s993 = sshll.u32 %s9, 4
      %s994 = int_to_ptr.hbm [resolvable:$true] %s993
      %996 = dma.vmem_to_hbm [thread:$0]  %s992, 32, %s994, [#allocation3]
    $region41: #{classifier_lstm_forward.1} parent=1 // pred_fallthru
      _
    // Predicated region
    $region42: #{classifier_lstm_forward.1} parent=1 // pred_check
      _
    $region43: #{classifier_lstm_forward.1} parent=1 // pred_check_branch
      %998 = sbr.rel (0) target = $region45
    $region44: #{classifier_lstm_forward.1} parent=1 // pred_region
      %1000 = dma.done [#allocation3], 32
    $region45: #{classifier_lstm_forward.1} parent=1 // pred_fallthru
      _
    %1001 = vsyncpa [#allocation3], 1

</llo_original>
